<compile_context>
chip_gen: v7x
topology: tpu7x:2x2x1
jax: 0.10.0
libtpu: 0.0.40
codegen_flags: <defaults>
</compile_context>

<pallas_src>
import math

import jax
import jax.numpy as jnp
import numpy as np
from jax.experimental import pallas as pl
from jax.experimental.pallas import tpu as pltpu

_SLOPE = 0.2
_INV_SQRT2 = 1.0 / math.sqrt(2.0)


def _leaky(x, slope=_SLOPE):
    return jnp.where(x > 0, x, slope * x)


def _round_up(v, m):
    return -(-v // m) * m


# ------------------------- Pallas fused ResBlk kernel -----------------------


def resblk_forward(x_nchw, params, *, normalize=False, downsample="none",
                   out_dtype=jnp.bfloat16):
    """Pallas ResBlk forward. x_nchw: (N, Cin, H, W) -> (N, Cout, H, W)."""
    assert not normalize, "TODO(synk): normalize=True (InstanceNorm2d) not implemented"
    assert downsample == "none", "TODO(synk): downsample != 'none' not implemented"

    N, Cin, H, W = x_nchw.shape
    w1, b1, w2, b2 = (params[k] for k in ("w1", "b1", "w2", "b2"))
    Cout = w2.shape[-1]
    wsc = params.get("wsc")
    if wsc is None:                      # learned_sc=False -> identity shortcut
        assert Cin == Cout, "identity shortcut requires dim_in == dim_out"
        wsc = jnp.eye(Cin, dtype=jnp.float32)

    # Flattened padded-pixel coordinate system (row stride = Wp).
    Hp, Wp = H + 2, W + 2
    P = Hp * Wp                 # all padded pixel positions
    D = 2 * (Wp + 1)            # tap halo (conv-of-conv) in flattened coords

    # Lane-dense (multiple-of-128) widths; slices below always stay in-bounds.
    P_pad = _round_up(P, 128)
    PBIG_pad = _round_up(P_pad + D, 128)       # window conv1 is evaluated on
    PBIGGER_pad = _round_up(PBIG_pad + D, 128)  # input slab width per element

    # ---- cheap XLA-side layout prep (bf16 throughout, no transposes) ----
    xpad = jnp.pad(x_nchw.astype(jnp.bfloat16),
                   ((0, 0), (0, 0), (1, 1), (1, 1)))          # (N, Cin, Hp, Wp)
    xflat = xpad.reshape(N, Cin, P)
    xbig = jnp.pad(xflat, ((0, 0), (0, 0), (D, PBIGGER_pad - P - D)))

    # Static interior mask over the PBIG_pad window (re-imposes the zero
    # padding conv2 must see, including the 128-multiple lane padding).
    q = np.arange(PBIG_pad)
    l = q - (Wp + 1)
    yy = l // Wp
    xx = l - yy * Wp
    interior = (l >= 0) & (l < P) & (yy >= 1) & (yy <= H) & (xx >= 1) & (xx <= W)
    mask = jnp.asarray(interior[None, :].astype(np.float32)).astype(jnp.bfloat16)

    # K-concatenated weights: w1k[o, t*Cin + i] = w1[dy, dx, i, o], t = dy*3+dx.
    w1k = jnp.transpose(w1, (3, 0, 1, 2)).reshape(Cin, 9 * Cin).astype(jnp.bfloat16)
    w2k = jnp.transpose(w2, (3, 0, 1, 2)).reshape(Cout, 9 * Cin)
    wfk = jnp.concatenate([w2k, wsc.T], axis=1).astype(jnp.bfloat16)  # (Cout, 10*Cin)
    b1r = b1.reshape(Cin, 1).astype(jnp.float32)
    b2r = b2.reshape(Cout, 1).astype(jnp.float32)

    taps = [dy * Wp + dx for dy in range(3) for dx in range(3)]

    def kernel(x_ref, mask_ref, w1k_ref, b1_ref, wfk_ref, b2_ref, o_ref):
        xp = x_ref[...]                                   # (Cin, PBIGGER_pad) bf16
        a = _leaky(xp)                                    # actv(x), once

        # conv1(actv(x)) on the PBIG_pad window: the 9 shifted taps are stacked
        # along K and contracted in a single MXU dot (K = 9*Cin).
        slab1 = jnp.concatenate([a[:, s:s + PBIG_pad] for s in taps], axis=0)
        h = jnp.dot(w1k_ref[...], slab1, preferred_element_type=jnp.float32)
        h = h + b1_ref[...]                               # (Cin, PBIG_pad) f32

        # actv(h), re-impose conv2's zero padding, single cast for the MXU.
        a2 = _leaky(h).astype(jnp.bfloat16) * mask_ref[...]

        # conv2(actv(h)) + learned 1x1 shortcut fused as a 10-group K-concat
        # (K = 10*Cin) -> one dot, one f32 accumulator.
        slab2 = jnp.concatenate(
            [a2[:, s:s + P_pad] for s in taps] + [xp[:, D:D + P_pad]], axis=0)
        acc = jnp.dot(wfk_ref[...], slab2, preferred_element_type=jnp.float32)
        acc = (acc + b2_ref[...]) * _INV_SQRT2
        o_ref[...] = acc.astype(o_ref.dtype)

    # Per-step VMEM working set estimate (double-buffered I/O + constants +
    # kernel temporaries); cap well under v7x's 64 MiB physical VMEM.
    bf, f4 = 2, 4
    need = (2 * Cin * PBIGGER_pad * bf + 2 * Cout * P_pad * bf
            + 2 * (PBIG_pad * bf + 9 * Cin * Cin * bf + 10 * Cin * Cout * bf
                   + (Cin + Cout) * f4)
            + Cin * PBIGGER_pad * bf + 9 * Cin * PBIG_pad * bf
            + Cin * PBIG_pad * (f4 + bf) + 10 * Cin * P_pad * bf
            + Cout * P_pad * f4)
    vmem_limit = int(min(max(4 * need, 16 << 20), 48 << 20))

    out_flat = pl.pallas_call(
        kernel,
        out_shape=jax.ShapeDtypeStruct((N, Cout, P_pad), out_dtype),
        grid=(N,),
        in_specs=[
            pl.BlockSpec((None, Cin, PBIGGER_pad), lambda n: (n, 0, 0)),
            pl.BlockSpec((1, PBIG_pad), lambda n: (0, 0)),
            pl.BlockSpec((Cin, 9 * Cin), lambda n: (0, 0)),
            pl.BlockSpec((Cin, 1), lambda n: (0, 0)),
            pl.BlockSpec((Cout, 10 * Cin), lambda n: (0, 0)),
            pl.BlockSpec((Cout, 1), lambda n: (0, 0)),
        ],
        out_specs=pl.BlockSpec((None, Cout, P_pad), lambda n: (n, 0, 0)),
        compiler_params=pltpu.CompilerParams(
            dimension_semantics=("parallel",),
            vmem_limit_bytes=vmem_limit),
    )(xbig, mask, w1k, b1r, wfk, b2r)

    # Drop lane padding and border pixels -> already NCHW, no transposes.
    out = out_flat[:, :, :P].reshape(N, Cout, Hp, Wp)[:, :, 1:Hp - 1, 1:Wp - 1]
    return out


# ------------------------- pure-JAX reference ------------------------------


def resblk_reference(x_nchw, params):
    x = jnp.transpose(x_nchw, (0, 2, 3, 1)).astype(jnp.float32)

    def conv3x3(t, w, b):
        y = jax.lax.conv_general_dilated(
            t, w, window_strides=(1, 1), padding="SAME",
            dimension_numbers=("NHWC", "HWIO", "NHWC"))
        return y + b

    a = _leaky(x)
    h = conv3x3(a, params["w1"], params["b1"])
    a2 = _leaky(h)
    res = conv3x3(a2, params["w2"], params["b2"])
    sc = jnp.einsum("nhwc,cd->nhwd", x, params["wsc"])
    out = (sc + res) / math.sqrt(2.0)
    return jnp.transpose(out, (0, 3, 1, 2))


# --------------------------------- main -------------------------------------


def _init_params(key, dim_in, dim_out):
    k1, k2, k3, k4, k5 = jax.random.split(key, 5)
    # Deterministic synthetic init (shapes match nn.Conv2d weights, HWIO layout).
    return {
        "w1": 0.1 * jax.random.normal(k1, (3, 3, dim_in, dim_in), jnp.float32),
        "b1": 0.1 * jax.random.normal(k2, (dim_in,), jnp.float32),
        "w2": 0.1 * jax.random.normal(k3, (3, 3, dim_in, dim_out), jnp.float32),
        "b2": 0.1 * jax.random.normal(k4, (dim_out,), jnp.float32),
        "wsc": 0.1 * jax.random.normal(k5, (dim_in, dim_out), jnp.float32),
    }


if __name__ == "__main__":
    N, dim_in, dim_out, H, W = 2, 4, 8, 16, 16

    key = jax.random.PRNGKey(0)
    kx, kp = jax.random.split(key)
    x = jax.random.normal(kx, (N, dim_in, H, W), jnp.float32)   # NCHW, like PyTorch
    params = _init_params(kp, dim_in, dim_out)

    out = jax.block_until_ready(resblk_forward(x, params))
    ref = jax.block_until_ready(resblk_reference(x, params))

    assert out.shape == (N, dim_out, H, W), out.shape
    # bf16 matmul operands / bf16 output (f32 accumulation) -> loosened tolerance.
    np.testing.assert_allclose(np.asarray(out).astype(np.float32),
                               np.asarray(ref), rtol=2e-2, atol=2e-2)
    print("KERNEL_OK")
</pallas_src>

<mosaic_0001>
module attributes {stable_mosaic.version = 11 : i64} {
  func.func @kernel(%arg0: i32, %arg1: memref<1x4x640xbf16, #tpu.memory_space<vmem>>, %arg2: memref<1x512xbf16, #tpu.memory_space<vmem>>, %arg3: memref<4x36xbf16, #tpu.memory_space<vmem>>, %arg4: memref<4x1xf32, #tpu.memory_space<vmem>>, %arg5: memref<8x40xbf16, #tpu.memory_space<vmem>>, %arg6: memref<8x1xf32, #tpu.memory_space<vmem>>, %arg7: memref<1x8x384xbf16, #tpu.memory_space<vmem>>) attributes {dimension_semantics = [#tpu.dimension_semantics<parallel>], iteration_bounds = array<i64: 2>, scalar_prefetch = 0 : i64, scratch_operands = 0 : i64, tpu.core_type = #tpu.core_type<tc>, window_params = [{transform_indices = @transform_0, window_bounds = array<i64: 1, 4, 640>}, {pipeline_mode = #tpu.pipeline_mode<synchronous>, transform_indices = @transform_1, window_bounds = array<i64: 1, 512>}, {pipeline_mode = #tpu.pipeline_mode<synchronous>, transform_indices = @transform_2, window_bounds = array<i64: 4, 36>}, {pipeline_mode = #tpu.pipeline_mode<synchronous>, transform_indices = @transform_3, window_bounds = array<i64: 4, 1>}, {pipeline_mode = #tpu.pipeline_mode<synchronous>, transform_indices = @transform_4, window_bounds = array<i64: 8, 40>}, {pipeline_mode = #tpu.pipeline_mode<synchronous>, transform_indices = @transform_5, window_bounds = array<i64: 8, 1>}, {transform_indices = @transform_6, window_bounds = array<i64: 1, 8, 384>}]} {
    %c0 = arith.constant 0 : index
    %c0_0 = arith.constant 0 : index
    %c0_1 = arith.constant 0 : index
    %0 = vector.load %arg1[%c0, %c0_0, %c0_1] : memref<1x4x640xbf16, #tpu.memory_space<vmem>>, vector<1x4x640xbf16>
    %1 = vector.shape_cast %0 : vector<1x4x640xbf16> to vector<4x640xbf16>
    %cst = arith.constant 0.000000e+00 : bf16
    %2 = vector.broadcast %cst : bf16 to vector<4x640xbf16>
    %3 = arith.cmpf ogt, %1, %2 : vector<4x640xbf16>
    %cst_2 = arith.constant 2.001950e-01 : bf16
    %4 = vector.broadcast %cst_2 : bf16 to vector<4x640xbf16>
    %5 = arith.mulf %4, %1 : vector<4x640xbf16>
    %6 = arith.select %3, %1, %5 : vector<4x640xi1>, vector<4x640xbf16>
    %7 = vector.extract_strided_slice %6 {offsets = [0, 0], sizes = [4, 512], strides = [1, 1]} : vector<4x640xbf16> to vector<4x512xbf16>
    %8 = vector.extract_strided_slice %6 {offsets = [0, 1], sizes = [4, 512], strides = [1, 1]} : vector<4x640xbf16> to vector<4x512xbf16>
    %9 = vector.extract_strided_slice %6 {offsets = [0, 2], sizes = [4, 512], strides = [1, 1]} : vector<4x640xbf16> to vector<4x512xbf16>
    %10 = vector.extract_strided_slice %6 {offsets = [0, 18], sizes = [4, 512], strides = [1, 1]} : vector<4x640xbf16> to vector<4x512xbf16>
    %11 = vector.extract_strided_slice %6 {offsets = [0, 19], sizes = [4, 512], strides = [1, 1]} : vector<4x640xbf16> to vector<4x512xbf16>
    %12 = vector.extract_strided_slice %6 {offsets = [0, 20], sizes = [4, 512], strides = [1, 1]} : vector<4x640xbf16> to vector<4x512xbf16>
    %13 = vector.extract_strided_slice %6 {offsets = [0, 36], sizes = [4, 512], strides = [1, 1]} : vector<4x640xbf16> to vector<4x512xbf16>
    %14 = vector.extract_strided_slice %6 {offsets = [0, 37], sizes = [4, 512], strides = [1, 1]} : vector<4x640xbf16> to vector<4x512xbf16>
    %15 = vector.extract_strided_slice %6 {offsets = [0, 38], sizes = [4, 512], strides = [1, 1]} : vector<4x640xbf16> to vector<4x512xbf16>
    %16 = tpu.concatenate %7, %8, %9, %10, %11, %12, %13, %14, %15 in 0 : vector<4x512xbf16>, vector<4x512xbf16>, vector<4x512xbf16>, vector<4x512xbf16>, vector<4x512xbf16>, vector<4x512xbf16>, vector<4x512xbf16>, vector<4x512xbf16>, vector<4x512xbf16> -> vector<36x512xbf16>
    %c0_3 = arith.constant 0 : index
    %c0_4 = arith.constant 0 : index
    %17 = vector.load %arg3[%c0_3, %c0_4] : memref<4x36xbf16, #tpu.memory_space<vmem>>, vector<4x36xbf16>
    %cst_5 = arith.constant dense<0.000000e+00> : vector<4x512xf32>
    %18 = tpu.matmul %17, %16, %cst_5 {dimension_numbers = #tpu.dot_dimension_numbers<[1], [0], [0], [1], [0, 0, 1, 1], [], []>} : vector<4x36xbf16>, vector<36x512xbf16>, vector<4x512xf32> -> vector<4x512xf32>
    %c0_6 = arith.constant 0 : index
    %c0_7 = arith.constant 0 : index
    %19 = vector.load %arg4[%c0_6, %c0_7] : memref<4x1xf32, #tpu.memory_space<vmem>>, vector<4x1xf32>
    %20 = vector.broadcast %19 : vector<4x1xf32> to vector<4x512xf32>
    %21 = arith.addf %18, %20 : vector<4x512xf32>
    %cst_8 = arith.constant 0.000000e+00 : f32
    %22 = vector.broadcast %cst_8 : f32 to vector<4x512xf32>
    %23 = arith.cmpf ogt, %21, %22 : vector<4x512xf32>
    %cst_9 = arith.constant 2.000000e-01 : f32
    %24 = vector.broadcast %cst_9 : f32 to vector<4x512xf32>
    %25 = arith.mulf %24, %21 : vector<4x512xf32>
    %26 = arith.select %23, %21, %25 : vector<4x512xi1>, vector<4x512xf32>
    %27 = arith.truncf %26 : vector<4x512xf32> to vector<4x512xbf16>
    %c0_10 = arith.constant 0 : index
    %c0_11 = arith.constant 0 : index
    %28 = vector.load %arg2[%c0_10, %c0_11] : memref<1x512xbf16, #tpu.memory_space<vmem>>, vector<1x512xbf16>
    %29 = vector.broadcast %28 : vector<1x512xbf16> to vector<4x512xbf16>
    %30 = arith.mulf %27, %29 : vector<4x512xbf16>
    %31 = vector.extract_strided_slice %30 {offsets = [0, 0], sizes = [4, 384], strides = [1, 1]} : vector<4x512xbf16> to vector<4x384xbf16>
    %32 = vector.extract_strided_slice %30 {offsets = [0, 1], sizes = [4, 384], strides = [1, 1]} : vector<4x512xbf16> to vector<4x384xbf16>
    %33 = vector.extract_strided_slice %30 {offsets = [0, 2], sizes = [4, 384], strides = [1, 1]} : vector<4x512xbf16> to vector<4x384xbf16>
    %34 = vector.extract_strided_slice %30 {offsets = [0, 18], sizes = [4, 384], strides = [1, 1]} : vector<4x512xbf16> to vector<4x384xbf16>
    %35 = vector.extract_strided_slice %30 {offsets = [0, 19], sizes = [4, 384], strides = [1, 1]} : vector<4x512xbf16> to vector<4x384xbf16>
    %36 = vector.extract_strided_slice %30 {offsets = [0, 20], sizes = [4, 384], strides = [1, 1]} : vector<4x512xbf16> to vector<4x384xbf16>
    %37 = vector.extract_strided_slice %30 {offsets = [0, 36], sizes = [4, 384], strides = [1, 1]} : vector<4x512xbf16> to vector<4x384xbf16>
    %38 = vector.extract_strided_slice %30 {offsets = [0, 37], sizes = [4, 384], strides = [1, 1]} : vector<4x512xbf16> to vector<4x384xbf16>
    %39 = vector.extract_strided_slice %30 {offsets = [0, 38], sizes = [4, 384], strides = [1, 1]} : vector<4x512xbf16> to vector<4x384xbf16>
    %40 = vector.extract_strided_slice %1 {offsets = [0, 38], sizes = [4, 384], strides = [1, 1]} : vector<4x640xbf16> to vector<4x384xbf16>
    %41 = tpu.concatenate %31, %32, %33, %34, %35, %36, %37, %38, %39, %40 in 0 : vector<4x384xbf16>, vector<4x384xbf16>, vector<4x384xbf16>, vector<4x384xbf16>, vector<4x384xbf16>, vector<4x384xbf16>, vector<4x384xbf16>, vector<4x384xbf16>, vector<4x384xbf16>, vector<4x384xbf16> -> vector<40x384xbf16>
    %c0_12 = arith.constant 0 : index
    %c0_13 = arith.constant 0 : index
    %42 = vector.load %arg5[%c0_12, %c0_13] : memref<8x40xbf16, #tpu.memory_space<vmem>>, vector<8x40xbf16>
    %cst_14 = arith.constant dense<0.000000e+00> : vector<8x384xf32>
    %43 = tpu.matmul %42, %41, %cst_14 {dimension_numbers = #tpu.dot_dimension_numbers<[1], [0], [0], [1], [0, 0, 1, 1], [], []>} : vector<8x40xbf16>, vector<40x384xbf16>, vector<8x384xf32> -> vector<8x384xf32>
    %c0_15 = arith.constant 0 : index
    %c0_16 = arith.constant 0 : index
    %44 = vector.load %arg6[%c0_15, %c0_16] : memref<8x1xf32, #tpu.memory_space<vmem>>, vector<8x1xf32>
    %45 = vector.broadcast %44 : vector<8x1xf32> to vector<8x384xf32>
    %46 = arith.addf %43, %45 : vector<8x384xf32>
    %cst_17 = arith.constant 0.707106769 : f32
    %47 = vector.broadcast %cst_17 : f32 to vector<8x384xf32>
    %48 = arith.mulf %46, %47 : vector<8x384xf32>
    %49 = arith.truncf %48 : vector<8x384xf32> to vector<8x384xbf16>
    %c0_18 = arith.constant 0 : index
    %c0_19 = arith.constant 0 : index
    %c0_20 = arith.constant 0 : index
    %50 = vector.load %arg7[%c0_18, %c0_19, %c0_20] : memref<1x8x384xbf16, #tpu.memory_space<vmem>>, vector<1x8x384xbf16>
    %51 = vector.shape_cast %50 : vector<1x8x384xbf16> to vector<8x384xbf16>
    %52 = vector.shape_cast %49 : vector<8x384xbf16> to vector<1x8x384xbf16>
    tpu.vector_store %arg7[%c0_18, %c0_19, %c0_20], %52 {strides = array<i32>} : memref<1x8x384xbf16, #tpu.memory_space<vmem>>, vector<1x8x384xbf16>,
    return
  }
  func.func @transform_0(%arg0: i32) -> (i32, i32, i32) {
    %c0_i32 = arith.constant 0 : i32
    %c0_i32_0 = arith.constant 0 : i32
    %c0_i32_1 = arith.constant 0 : i32
    return %arg0, %c0_i32, %c0_i32_0 : i32, i32, i32
  }
  func.func @transform_1(%arg0: i32) -> (i32, i32) {
    %c0_i32 = arith.constant 0 : i32
    %c0_i32_0 = arith.constant 0 : i32
    %c0_i32_1 = arith.constant 0 : i32
    return %c0_i32, %c0_i32_0 : i32, i32
  }
  func.func @transform_2(%arg0: i32) -> (i32, i32) {
    %c0_i32 = arith.constant 0 : i32
    %c0_i32_0 = arith.constant 0 : i32
    %c0_i32_1 = arith.constant 0 : i32
    return %c0_i32, %c0_i32_0 : i32, i32
  }
  func.func @transform_3(%arg0: i32) -> (i32, i32) {
    %c0_i32 = arith.constant 0 : i32
    %c0_i32_0 = arith.constant 0 : i32
    %c0_i32_1 = arith.constant 0 : i32
    return %c0_i32, %c0_i32_0 : i32, i32
  }
  func.func @transform_4(%arg0: i32) -> (i32, i32) {
    %c0_i32 = arith.constant 0 : i32
    %c0_i32_0 = arith.constant 0 : i32
    %c0_i32_1 = arith.constant 0 : i32
    return %c0_i32, %c0_i32_0 : i32, i32
  }
  func.func @transform_5(%arg0: i32) -> (i32, i32) {
    %c0_i32 = arith.constant 0 : i32
    %c0_i32_0 = arith.constant 0 : i32
    %c0_i32_1 = arith.constant 0 : i32
    return %c0_i32, %c0_i32_0 : i32, i32
  }
  func.func @transform_6(%arg0: i32) -> (i32, i32, i32) {
    %c0_i32 = arith.constant 0 : i32
    %c0_i32_0 = arith.constant 0 : i32
    %c0_i32_1 = arith.constant 0 : i32
    return %arg0, %c0_i32, %c0_i32_0 : i32, i32, i32
  }
}

</mosaic_0001>

<llo_original>
// kernel: tpu_custom_call.1
$region0: #{tpu_custom_call.1}
  #allocation0 [shape = 'u32[]', space=smem, size = 0x4, offset = 0x4, fixed_abs, tag = 'smem constant byte address 0x4 - core index']
  #allocation1 [shape = 'u32[144,128]{1,0:T(1,128)}', space=vmem, size = 0x12000, scoped, tag = 'internal scratch']
  %s0 = inlined_call_operand.hbm [shape: bf16[2,4,640], index: 0, kind: input, shape index: {}]
  %s1 = inlined_call_operand.vmem [shape: bf16[1,512], index: 1, kind: input, shape index: {}]
  %s2 = inlined_call_operand.vmem [shape: bf16[4,36], index: 2, kind: input, shape index: {}]
  %s3 = inlined_call_operand.vmem [shape: f32[4,1], index: 3, kind: input, shape index: {}]
  %s4 = inlined_call_operand.vmem [shape: bf16[8,40], index: 4, kind: input, shape index: {}]
  %s5 = inlined_call_operand.vmem [shape: f32[8,1], index: 5, kind: input, shape index: {}]
  %s6 = inlined_call_operand.hbm [shape: bf16[2,8,384], index: 6, kind: output, shape index: {}]
  %s7 = sld [smem:[#allocation0]]
  $region61: #{tpu_custom_call.1} parent=0
    _
  %s9 = ssub.s32 1, %s7
  %s10 = scalar_select 0, %s9, %s7
  $region1: #{tpu_custom_call.1} parent=0
    #allocation2 [shape = 'u8[10240]{0}', space=vmem, size = 0x2800, scoped, tag = 'input window, operand 0']
    #allocation3 [shape = 's32[2]{0}', space=sflag, size = 0x8, scoped, tag = 'scoped memory for tpu_custom_call.1']
    #allocation4 [shape = 's32[2]{0}', space=sflag, size = 0x8, scoped, tag = 'scoped memory for tpu_custom_call.1']
    #allocation5 [shape = 'u8[12288]{0}', space=vmem, size = 0x3000, scoped, tag = 'output window, operand 0']
    %11 = vsyncpa [#allocation3], 0
    %s12 = scalar_lea.sflag [#allocation3], 1
    %13 = vsyncpa %s12, 0
    %14 = vsyncpa [#allocation4], 0
    %s15 = scalar_lea.sflag [#allocation4], 1
    %16 = vsyncpa %s15, 0
    loop: start=0, step=1, limit=4
    $region2: #{tpu_custom_call.1} parent=1 // loop_pre_header
      _
    $region3: #{tpu_custom_call.1} parent=1 // loop_header
      %s18 = sphi 0, %s22
      %p19 = scmp.ge.s32.totalorder %s18, 4
      %s28 = sphi 0, %s30
      %s31 = sphi 0, %s28
      %s32 = sphi 0, %s31
      %s48 = sphi 0, %s32
      %s52 = sphi 0, %s52
      %s54 = sphi 0, %s52
      %s55 = sphi 0, %s54
      %s69 = sphi 0, %s55
      %s73 = sphi 0, %s73
      %s75 = sphi 0, %s73
      %s76 = sphi 0, %s75
      %s90 = sphi 0, %s76
      %s94 = sphi 0, %s94
      %s96 = sphi 0, %s94
      %s97 = sphi 0, %s96
      %s111 = sphi 0, %s97
      %s115 = sphi 0, %s115
      %s117 = sphi 0, %s115
      %s118 = sphi 0, %s117
      %s132 = sphi 0, %s118
      %s136 = sphi 0, %s136
      %s138 = sphi 0, %s136
      %s139 = sphi 0, %s138
      %s153 = sphi 0, %s139
      %s159 = sphi 0, %s161
      %s162 = sphi 0, %s159
      %s163 = sphi 0, %s162
      %s179 = sphi 0, %s163
    $region4: #{tpu_custom_call.1} parent=1 // loop_header_branch
      %21 = sbr.rel (%p19) target = $region8
    $region5: #{tpu_custom_call.1} parent=1 // loop_body
      %s23 = ssub.s32 %s18, 1
      %s24 = ssub.s32 %s18, 2
      %s25 = sadd.s32 %s18, 1
      %s26 = ssub.s32 %s18, %s25
      %p27 = scmp.eq.s32.totalorder %s26, 0
      %s29 = sadd.s32 %s28, 1
      %s30 = scalar_select %p27, %s28, %s29
      %p33 = pneg %p27
      %p34 = scmp.eq.s32.totalorder %s18, 1
      %p35 = por %p33, %p34
      %p36 = scmp.ne.s32.totalorder %s28, %s31
      %p37 = scmp.eq.s32.totalorder %s18, 0
      %p38 = por %p36, %p37
      %p39 = scmp.ne.s32.totalorder %s28, %s31
      %p40 = scmp.eq.s32.totalorder %s23, 1
      %p41 = por %p39, %p40
      %p42 = scmp.ne.s32.totalorder %s31, %s32
      %p43 = scmp.eq.s32.totalorder %s23, 0
      %p44 = por %p42, %p43
      %p45 = scmp.ne.s32.totalorder %s31, %s32
      %p46 = scmp.eq.s32.totalorder %s24, 1
      %p47 = por %p45, %p46
      %p49 = scmp.ne.s32.totalorder %s32, %s48
      %p50 = scmp.eq.s32.totalorder %s24, 0
      %p51 = por %p49, %p50
      %s53 = sadd.s32 %s52, 1
      %p56 = scmp.eq.s32.totalorder %s18, 1
      %p57 = scmp.ne.s32.totalorder %s52, %s54
      %p58 = scmp.eq.s32.totalorder %s18, 0
      %p59 = por %p57, %p58
      %p60 = scmp.ne.s32.totalorder %s52, %s54
      %p61 = scmp.eq.s32.totalorder %s23, 1
      %p62 = por %p60, %p61
      %p63 = scmp.ne.s32.totalorder %s54, %s55
      %p64 = scmp.eq.s32.totalorder %s23, 0
      %p65 = por %p63, %p64
      %p66 = scmp.ne.s32.totalorder %s54, %s55
      %p67 = scmp.eq.s32.totalorder %s24, 1
      %p68 = por %p66, %p67
      %p70 = scmp.ne.s32.totalorder %s55, %s69
      %p71 = scmp.eq.s32.totalorder %s24, 0
      %p72 = por %p70, %p71
      %s74 = sadd.s32 %s73, 1
      %p77 = scmp.eq.s32.totalorder %s18, 1
      %p78 = scmp.ne.s32.totalorder %s73, %s75
      %p79 = scmp.eq.s32.totalorder %s18, 0
      %p80 = por %p78, %p79
      %p81 = scmp.ne.s32.totalorder %s73, %s75
      %p82 = scmp.eq.s32.totalorder %s23, 1
      %p83 = por %p81, %p82
      %p84 = scmp.ne.s32.totalorder %s75, %s76
      %p85 = scmp.eq.s32.totalorder %s23, 0
      %p86 = por %p84, %p85
      %p87 = scmp.ne.s32.totalorder %s75, %s76
      %p88 = scmp.eq.s32.totalorder %s24, 1
      %p89 = por %p87, %p88
      %p91 = scmp.ne.s32.totalorder %s76, %s90
      %p92 = scmp.eq.s32.totalorder %s24, 0
      %p93 = por %p91, %p92
      %s95 = sadd.s32 %s94, 1
      %p98 = scmp.eq.s32.totalorder %s18, 1
      %p99 = scmp.ne.s32.totalorder %s94, %s96
      %p100 = scmp.eq.s32.totalorder %s18, 0
      %p101 = por %p99, %p100
      %p102 = scmp.ne.s32.totalorder %s94, %s96
      %p103 = scmp.eq.s32.totalorder %s23, 1
      %p104 = por %p102, %p103
      %p105 = scmp.ne.s32.totalorder %s96, %s97
      %p106 = scmp.eq.s32.totalorder %s23, 0
      %p107 = por %p105, %p106
      %p108 = scmp.ne.s32.totalorder %s96, %s97
      %p109 = scmp.eq.s32.totalorder %s24, 1
      %p110 = por %p108, %p109
      %p112 = scmp.ne.s32.totalorder %s97, %s111
      %p113 = scmp.eq.s32.totalorder %s24, 0
      %p114 = por %p112, %p113
      %s116 = sadd.s32 %s115, 1
      %p119 = scmp.eq.s32.totalorder %s18, 1
      %p120 = scmp.ne.s32.totalorder %s115, %s117
      %p121 = scmp.eq.s32.totalorder %s18, 0
      %p122 = por %p120, %p121
      %p123 = scmp.ne.s32.totalorder %s115, %s117
      %p124 = scmp.eq.s32.totalorder %s23, 1
      %p125 = por %p123, %p124
      %p126 = scmp.ne.s32.totalorder %s117, %s118
      %p127 = scmp.eq.s32.totalorder %s23, 0
      %p128 = por %p126, %p127
      %p129 = scmp.ne.s32.totalorder %s117, %s118
      %p130 = scmp.eq.s32.totalorder %s24, 1
      %p131 = por %p129, %p130
      %p133 = scmp.ne.s32.totalorder %s118, %s132
      %p134 = scmp.eq.s32.totalorder %s24, 0
      %p135 = por %p133, %p134
      %s137 = sadd.s32 %s136, 1
      %p140 = scmp.eq.s32.totalorder %s18, 1
      %p141 = scmp.ne.s32.totalorder %s136, %s138
      %p142 = scmp.eq.s32.totalorder %s18, 0
      %p143 = por %p141, %p142
      %p144 = scmp.ne.s32.totalorder %s136, %s138
      %p145 = scmp.eq.s32.totalorder %s23, 1
      %p146 = por %p144, %p145
      %p147 = scmp.ne.s32.totalorder %s138, %s139
      %p148 = scmp.eq.s32.totalorder %s23, 0
      %p149 = por %p147, %p148
      %p150 = scmp.ne.s32.totalorder %s138, %s139
      %p151 = scmp.eq.s32.totalorder %s24, 1
      %p152 = por %p150, %p151
      %p154 = scmp.ne.s32.totalorder %s139, %s153
      %p155 = scmp.eq.s32.totalorder %s24, 0
      %p156 = por %p154, %p155
      %s157 = ssub.s32 %s18, %s25
      %p158 = scmp.eq.s32.totalorder %s157, 0
      %s160 = sadd.s32 %s159, 1
      %s161 = scalar_select %p158, %s159, %s160
      %p164 = pneg %p158
      %p165 = scmp.eq.s32.totalorder %s18, 1
      %p166 = por %p164, %p165
      %p167 = scmp.ne.s32.totalorder %s159, %s162
      %p168 = scmp.eq.s32.totalorder %s18, 0
      %p169 = por %p167, %p168
      %p170 = scmp.ne.s32.totalorder %s159, %s162
      %p171 = scmp.eq.s32.totalorder %s23, 1
      %p172 = por %p170, %p171
      %p173 = scmp.ne.s32.totalorder %s162, %s163
      %p174 = scmp.eq.s32.totalorder %s23, 0
      %p175 = por %p173, %p174
      %p176 = scmp.ne.s32.totalorder %s162, %s163
      %p177 = scmp.eq.s32.totalorder %s24, 1
      %p178 = por %p176, %p177
      %p180 = scmp.ne.s32.totalorder %s163, %s179
      %p181 = scmp.eq.s32.totalorder %s24, 0
      %p182 = por %p180, %p181
      %p183 = scmp.le.s32.totalorder 1, %s18
      %p184 = scmp.lt.s32.totalorder %s18, 3
      %p185 = pnand %p183, %p184
      %p186 = pneg %p185
      // Predicated region
      $region9: #{tpu_custom_call.1} parent=5 // pred_check
        _
      $region10: #{tpu_custom_call.1} parent=5 // pred_check_branch
        %188 = sbr.rel (%p185) target = $region12
      $region11: #{tpu_custom_call.1} parent=5 // pred_region
        %s189 = ssub.s32 %s18, 1
        // Predicated region
        $region13: #{tpu_custom_call.1} parent=11 // pred_check
          %p190 = pneg %p65
        $region14: #{tpu_custom_call.1} parent=11 // pred_check_branch
          %192 = sbr.rel (%p190) target = $region16
        $region15: #{tpu_custom_call.1} parent=11 // pred_region
          _
        $region16: #{tpu_custom_call.1} parent=11 // pred_fallthru
          _
        // Predicated region
        $region17: #{tpu_custom_call.1} parent=11 // pred_check
          %p193 = pneg %p86
        $region18: #{tpu_custom_call.1} parent=11 // pred_check_branch
          %195 = sbr.rel (%p193) target = $region20
        $region19: #{tpu_custom_call.1} parent=11 // pred_region
          _
        $region20: #{tpu_custom_call.1} parent=11 // pred_fallthru
          _
        // Predicated region
        $region21: #{tpu_custom_call.1} parent=11 // pred_check
          %p196 = pneg %p107
        $region22: #{tpu_custom_call.1} parent=11 // pred_check_branch
          %198 = sbr.rel (%p196) target = $region24
        $region23: #{tpu_custom_call.1} parent=11 // pred_region
          _
        $region24: #{tpu_custom_call.1} parent=11 // pred_fallthru
          _
        // Predicated region
        $region25: #{tpu_custom_call.1} parent=11 // pred_check
          %p199 = pneg %p128
        $region26: #{tpu_custom_call.1} parent=11 // pred_check_branch
          %201 = sbr.rel (%p199) target = $region28
        $region27: #{tpu_custom_call.1} parent=11 // pred_region
          _
        $region28: #{tpu_custom_call.1} parent=11 // pred_fallthru
          _
        // Predicated region
        $region29: #{tpu_custom_call.1} parent=11 // pred_check
          %p202 = pneg %p149
        $region30: #{tpu_custom_call.1} parent=11 // pred_check_branch
          %204 = sbr.rel (%p202) target = $region32
        $region31: #{tpu_custom_call.1} parent=11 // pred_region
          _
        $region32: #{tpu_custom_call.1} parent=11 // pred_fallthru
          _
      $region12: #{tpu_custom_call.1} parent=5 // pred_fallthru
        _
      %p205 = scmp.lt.s32.totalorder %s18, 2
      // Predicated region
      $region33: #{tpu_custom_call.1} parent=5 // pred_check
        %p206 = pneg %p205
      $region34: #{tpu_custom_call.1} parent=5 // pred_check_branch
        %208 = sbr.rel (%p206) target = $region36
      $region35: #{tpu_custom_call.1} parent=5 // pred_region
        // Predicated region
        $region37: #{tpu_custom_call.1} parent=35 // pred_check
          %p209 = pneg %p38
        $region38: #{tpu_custom_call.1} parent=35 // pred_check_branch
          %211 = sbr.rel (%p209) target = $region40
        $region39: #{tpu_custom_call.1} parent=35 // pred_region
          %s212 = sand.u32 %s28, 1
          %s213 = scalar_lea.sflag [#allocation3], %s212
          %s214 = sand.u32 %s28, 1
          %s215 = smul.addr %s214, 10
          %s216 = scalar_lea.vmem [#allocation2], %s215
          %s218 = ssub.s32 160, 160
          %219 = vsyncadd %s213, %s218
          %s220 = smul.addr %s18, 5
          %s221 = smul.addr %s220, 32
          %s222 = scalar_lea.hbm %s0, %s221
          %s224 = sshll.u32 %s216, 4
          %s225 = int_to_ptr.vmem [resolvable:$true] %s224
          %227 = dma.hbm_to_vmem [thread:$0]  %s222, 160, %s225, %s213
        $region40: #{tpu_custom_call.1} parent=35 // pred_fallthru
          _
      $region36: #{tpu_custom_call.1} parent=5 // pred_fallthru
        _
      %p228 = scmp.le.s32.totalorder 1, %s18
      %p229 = scmp.lt.s32.totalorder %s18, 3
      %p230 = pnand %p228, %p229
      %p231 = pneg %p230
      // Predicated region
      $region41: #{tpu_custom_call.1} parent=5 // pred_check
        _
      $region42: #{tpu_custom_call.1} parent=5 // pred_check_branch
        %233 = sbr.rel (%p230) target = $region44
      $region43: #{tpu_custom_call.1} parent=5 // pred_region
        %s234 = ssub.s32 %s18, 1
        %s235 = sand.u32 %s31, 1
        %s236 = scalar_lea.sflag [#allocation3], %s235
        %s237 = sand.u32 %s31, 1
        %s238 = smul.addr %s237, 10
        %s239 = scalar_lea.vmem [#allocation2], %s238
        // Predicated region
        $region45: #{tpu_custom_call.1} parent=43 // pred_check
          %p240 = pneg %p44
        $region46: #{tpu_custom_call.1} parent=43 // pred_check_branch
          %242 = sbr.rel (%p240) target = $region48
        $region47: #{tpu_custom_call.1} parent=43 // pred_region
          %243 = dma.done %s236, 160
        $region48: #{tpu_custom_call.1} parent=43 // pred_fallthru
          _
        %s244 = sand.u32 %s31, 1
        %s245 = scalar_lea.sflag [#allocation3], %s244
        %s246 = sand.u32 %s31, 1
        %s247 = smul.addr %s246, 10
        %s248 = scalar_lea.vmem [#allocation2], %s247
        %p249 = pneg %p44
        %p250 = pneg %p41
        %p251 = pneg %p65
        %p252 = pneg %p62
        %p253 = pneg %p86
        %p254 = pneg %p83
        %p255 = pneg %p107
        %p256 = pneg %p104
        %p257 = pneg %p128
        %p258 = pneg %p125
        %p259 = pneg %p149
        %p260 = pneg %p146
        %p261 = pneg %p175
        %p262 = pneg %p172
        %s263 = sand.u32 %s162, 1
        %s264 = scalar_lea.sflag [#allocation4], %s263
        %s265 = sand.u32 %s162, 1
        %s266 = smul.addr %s265, 12
        %s267 = scalar_lea.vmem [#allocation5], %s266
        %v270 = vld [vmem:[%s239] sm:$0xff]
        %v271 = vld [vmem:[%s239 + $0x8] sm:$0x3]
        %vm272 = vcmp.gt.bf16.partialorder %v270, 0
        %vm273 = vcmp.gt.bf16.partialorder %v271, 0
        %v274 = vmul.bf16 %v270, 1045249613
        %v275 = vmul.bf16 %v271, 1045249613
        %v276 = vsel %vm272, %v270, %v274
        %v277 = vsel %vm273, %v271, %v275
        %v279 = vcombine.high %v276, %v276
        %v281 = vunpack.c.l.s4 1983009808
        %v282 = vunpack.c.0.s8 %v281
        %v283 = vlaneseq
        %v284 = vshrl.u32 %v283, 7
        %v285 = vsub.s32 %v282, %v284
        %v286 = vrot.slane %v276, %v285
        %v288 = vunpack.c.l.s4 1983009808
        %v289 = vunpack.c.0.s8 %v288
        %v290 = vlaneseq
        %v291 = vshrl.u32 %v290, 7
        %v292 = vsub.s32 %v289, %v291
        %v293 = vrot.slane %v279, %v292
        %v294 = vcombine.high %v286, %v286
        %v295 = vcombine.high %v293, %v293
        %v297 = vcombine.low %v276, %v276
        %v299 = vunpack.c.l.s4 1983009808
        %v300 = vunpack.c.0.s8 %v299
        %v301 = vlaneseq
        %v302 = vshrl.u32 %v301, 7
        %v303 = vsub.s32 %v300, %v302
        %v304 = vrot.slane %v297, %v303
        %v305 = vcombine.high %v304, %v304
        %v306 = vcombine.low %v277, %v277
        %v308 = vunpack.c.l.s4 1983009808
        %v309 = vunpack.c.0.s8 %v308
        %v310 = vlaneseq
        %v311 = vshrl.u32 %v310, 7
        %v312 = vsub.s32 %v309, %v311
        %v313 = vrot.slane %v306, %v312
        %v315 = vunpack.c.l.s4 1983009808
        %v316 = vunpack.c.0.s8 %v315
        %v317 = vlaneseq
        %v318 = vshrl.u32 %v317, 7
        %v319 = vsub.s32 %v316, %v318
        %v320 = vrot.slane %v277, %v319
        %321 = vrot.lane.b32.xlu0 %v304, 127
        %v322 = vpop.permute.xlu0 %321
        %323 = vrot.lane.b32.xlu0 %v305, 127
        %v324 = vpop.permute.xlu0 %323
        %325 = vrot.lane.b32.xlu0 %v286, 127
        %v326 = vpop.permute.xlu0 %325
        %327 = vrot.lane.b32.xlu0 %v294, 127
        %v328 = vpop.permute.xlu0 %327
        %329 = vrot.lane.b32.xlu0 %v313, 127
        %v330 = vpop.permute.xlu0 %329
        %vm331 = vcmask 1039360
        %v332 = vsel %vm331, %v322, %v324
        %v333 = vsel %vm331, %v324, %v326
        %v334 = vsel %vm331, %v326, %v328
        %v335 = vsel %vm331, %v328, %v330
        %v336 = vcombine.low %v286, %v286
        %v337 = vcombine.low %v293, %v293
        %v338 = vcombine.low %v320, %v320
        %339 = vrot.lane.b32.xlu0 %v336, 126
        %v340 = vpop.permute.xlu0 %339
        %341 = vrot.lane.b32.xlu0 %v286, 126
        %v342 = vpop.permute.xlu0 %341
        %343 = vrot.lane.b32.xlu0 %v337, 126
        %v344 = vpop.permute.xlu0 %343
        %345 = vrot.lane.b32.xlu0 %v293, 126
        %v346 = vpop.permute.xlu0 %345
        %347 = vrot.lane.b32.xlu0 %v338, 126
        %v348 = vpop.permute.xlu0 %347
        %vm349 = vcmask 1031168
        %v350 = vsel %vm349, %v340, %v342
        %v351 = vsel %vm349, %v342, %v344
        %v352 = vsel %vm349, %v344, %v346
        %v353 = vsel %vm349, %v346, %v348
        %v354 = vcombine.low %v304, %v304
        %v355 = vcombine.low %v313, %v313
        %356 = vrot.lane.b32.xlu0 %v354, 110
        %v357 = vpop.permute.xlu0 %356
        %358 = vrot.lane.b32.xlu0 %v304, 110
        %v359 = vpop.permute.xlu0 %358
        %360 = vrot.lane.b32.xlu0 %v336, 110
        %v361 = vpop.permute.xlu0 %360
        %362 = vrot.lane.b32.xlu0 %v286, 110
        %v363 = vpop.permute.xlu0 %362
        %364 = vrot.lane.b32.xlu0 %v355, 110
        %v365 = vpop.permute.xlu0 %364
        %vm366 = vcmask 900096
        %v367 = vsel %vm366, %v357, %v359
        %v368 = vsel %vm366, %v359, %v361
        %v369 = vsel %vm366, %v361, %v363
        %v370 = vsel %vm366, %v363, %v365
        %371 = vrot.lane.b32.xlu0 %v286, 109
        %v372 = vpop.permute.xlu0 %371
        %373 = vrot.lane.b32.xlu0 %v294, 109
        %v374 = vpop.permute.xlu0 %373
        %375 = vrot.lane.b32.xlu0 %v293, 109
        %v376 = vpop.permute.xlu0 %375
        %377 = vrot.lane.b32.xlu0 %v295, 109
        %v378 = vpop.permute.xlu0 %377
        %379 = vrot.lane.b32.xlu0 %v320, 109
        %v380 = vpop.permute.xlu0 %379
        %vm381 = vcmask 891904
        %v382 = vsel %vm381, %v372, %v374
        %v383 = vsel %vm381, %v374, %v376
        %v384 = vsel %vm381, %v376, %v378
        %v385 = vsel %vm381, %v378, %v380
        %386 = vrot.lane.b32.xlu0 %v304, 108
        %v387 = vpop.permute.xlu0 %386
        %388 = vrot.lane.b32.xlu0 %v305, 108
        %v389 = vpop.permute.xlu0 %388
        %390 = vrot.lane.b32.xlu0 %v286, 108
        %v391 = vpop.permute.xlu0 %390
        %392 = vrot.lane.b32.xlu0 %v294, 108
        %v393 = vpop.permute.xlu0 %392
        %394 = vrot.lane.b32.xlu0 %v313, 108
        %v395 = vpop.permute.xlu0 %394
        %vm396 = vcmask 883712
        %v397 = vsel %vm396, %v387, %v389
        %v398 = vsel %vm396, %v389, %v391
        %v399 = vsel %vm396, %v391, %v393
        %v400 = vsel %vm396, %v393, %v395
        %401 = vrot.lane.b32.xlu0 %v336, 92
        %v402 = vpop.permute.xlu0 %401
        %403 = vrot.lane.b32.xlu0 %v286, 92
        %v404 = vpop.permute.xlu0 %403
        %405 = vrot.lane.b32.xlu0 %v337, 92
        %v406 = vpop.permute.xlu0 %405
        %407 = vrot.lane.b32.xlu0 %v293, 92
        %v408 = vpop.permute.xlu0 %407
        %409 = vrot.lane.b32.xlu0 %v338, 92
        %v410 = vpop.permute.xlu0 %409
        %vm411 = vcmask 752640
        %v412 = vsel %vm411, %v402, %v404
        %v413 = vsel %vm411, %v404, %v406
        %v414 = vsel %vm411, %v406, %v408
        %v415 = vsel %vm411, %v408, %v410
        %416 = vrot.lane.b32.xlu0 %v354, 91
        %v417 = vpop.permute.xlu0 %416
        %418 = vrot.lane.b32.xlu0 %v304, 91
        %v419 = vpop.permute.xlu0 %418
        %420 = vrot.lane.b32.xlu0 %v336, 91
        %v421 = vpop.permute.xlu0 %420
        %422 = vrot.lane.b32.xlu0 %v286, 91
        %v423 = vpop.permute.xlu0 %422
        %424 = vrot.lane.b32.xlu0 %v355, 91
        %v425 = vpop.permute.xlu0 %424
        %vm426 = vcmask 744448
        %v427 = vsel %vm426, %v417, %v419
        %v428 = vsel %vm426, %v419, %v421
        %v429 = vsel %vm426, %v421, %v423
        %v430 = vsel %vm426, %v423, %v425
        %431 = vrot.lane.b32.xlu0 %v286, 90
        %v432 = vpop.permute.xlu0 %431
        %433 = vrot.lane.b32.xlu0 %v294, 90
        %v434 = vpop.permute.xlu0 %433
        %435 = vrot.lane.b32.xlu0 %v293, 90
        %v436 = vpop.permute.xlu0 %435
        %437 = vrot.lane.b32.xlu0 %v295, 90
        %v438 = vpop.permute.xlu0 %437
        %439 = vrot.lane.b32.xlu0 %v320, 90
        %v440 = vpop.permute.xlu0 %439
        %vm441 = vcmask 736256
        %v442 = vsel %vm441, %v432, %v434
        %v443 = vsel %vm441, %v434, %v436
        %v444 = vsel %vm441, %v436, %v438
        %v445 = vsel %vm441, %v438, %v440
        %vm446 = vcmask 1041408
        %v449 = vsel %vm446, %v286, %v332
        %v452 = vsel %vm446, %v294, %v333
        %v455 = vsel %vm446, %v293, %v334
        %v458 = vsel %vm446, %v295, %v335
        %vm459 = vcmask 1043456
        %v461 = vsel %vm459, %v449, %v350
        %v463 = vsel %vm459, %v452, %v351
        %v465 = vsel %vm459, %v455, %v352
        %v467 = vsel %vm459, %v458, %v353
        %vm468 = vcmask 1045504
        %v470 = vsel %vm468, %v461, %v367
        %v473 = vsel %vm468, %v463, %v368
        %v476 = vsel %vm468, %v465, %v369
        %v479 = vsel %vm468, %v467, %v370
        %v483 = vsel %vm446, %v382, %v397
        %v486 = vsel %vm446, %v383, %v398
        %v489 = vsel %vm446, %v384, %v399
        %v492 = vsel %vm446, %v385, %v400
        %v494 = vsel %vm459, %v483, %v412
        %v496 = vsel %vm459, %v486, %v413
        %v498 = vsel %vm459, %v489, %v414
        %v500 = vsel %vm459, %v492, %v415
        %v502 = vsel %vm468, %v494, %v427
        %v505 = vsel %vm468, %v496, %v428
        %v508 = vsel %vm468, %v498, %v429
        %v511 = vsel %vm468, %v500, %v430
        %v513 = vld [vmem:[%s2] sm:$0x3]
        %v514 = vld [vmem:[%s3] sm:$0xf]
        %516 = vset.pattern.permute.xlu0 0
        %517 = vperm.xlu0 %516, %v514
        %v518 = vpop.permute.xlu0 %517
        %vm520 = vcmask 293888
        %v522 = vsel %vm520, %v513, 0
        %v525 = vsel %vm446, %v442, 0
        %v528 = vsel %vm446, %v443, 0
        %v531 = vsel %vm446, %v444, 0
        %v534 = vsel %vm446, %v445, 0
        %536 = vmatprep.subr.bf16.mxu0 %v473
        %537 = vmatpush1.bf16.msra.mxu0 %v470
        %538 = vmatprep.subr.bf16.mxu0 %v505
        %539 = vmatpush1.bf16.msra.mxu0 %v502
        %540 = vmatprep.subr.bf16.mxu0 %v528
        %541 = vmatpush1.bf16.msra.mxu0 %v525
        %542 = vmatprep.subr.bf16.mxu0 0
        %543 = vmatpush1.bf16.msra.mxu0 0
        %544 = vmatprep.subr.bf16.mxu0 0
        %545 = vmatpush1.bf16.msra.mxu0 0
        %546 = vmatprep.subr.bf16.mxu0 0
        %547 = vmatpush1.bf16.msra.mxu0 0
        %548 = vmatprep.subr.bf16.mxu0 0
        %549 = vmatpush1.bf16.msra.mxu0 0
        %550 = vmatprep.subr.bf16.mxu0 0
        %551 = vmatpush1.bf16.msra.mxu0 0
        %552 = vmatprep.subr.bf16.mxu0 0
        %553 = vmatpush1.bf16.msra.mxu0 0
        %554 = vmatprep.subr.bf16.mxu0 0
        %555 = vmatpush1.bf16.msra.mxu0 0
        %556 = vmatprep.subr.bf16.mxu0 0
        %557 = vmatpush1.bf16.msra.mxu0 0
        %558 = vmatprep.subr.bf16.mxu0 0
        %559 = vmatpush1.bf16.msra.mxu0 0
        %560 = vmatprep.subr.bf16.mxu0 0
        %561 = vmatpush1.bf16.msra.mxu0 0
        %562 = vmatprep.subr.bf16.mxu0 0
        %563 = vmatpush1.bf16.msra.mxu0 0
        %564 = vmatprep.subr.bf16.mxu0 0
        %565 = vmatpush1.bf16.msra.mxu0 0
        %566 = vmatprep.subr.bf16.mxu0 0
        %567 = vmatpush1.bf16.msra.mxu0 0
        %568 = vmatprep.mubr.bf16.mxu0 0
        %569 = vmatmul.mubr.bf16.gmra.mrb[0].mxu0 %v522
        %v570 = vpop.f32.mrb[0].mxu0
        %v571 = vadd.f32 %v518, %v570
        %v572 = vpop.f32.mrb[0].mxu0
        %v573 = vadd.f32 %v518, %v572
        %v574 = vpop.f32.mrb[0].mxu0
        %v575 = vpop.f32.mrb[0].mxu0
        %576 = vdwg.mxu0
        %577 = vmatprep.subr.bf16.mxu0 %v479
        %578 = vmatpush1.bf16.msra.mxu0 %v476
        %579 = vmatprep.subr.bf16.mxu0 %v511
        %580 = vmatpush1.bf16.msra.mxu0 %v508
        %581 = vmatprep.subr.bf16.mxu0 %v534
        %582 = vmatpush1.bf16.msra.mxu0 %v531
        %583 = vmatprep.subr.bf16.mxu0 0
        %584 = vmatpush1.bf16.msra.mxu0 0
        %585 = vmatprep.subr.bf16.mxu0 0
        %586 = vmatpush1.bf16.msra.mxu0 0
        %587 = vmatprep.subr.bf16.mxu0 0
        %588 = vmatpush1.bf16.msra.mxu0 0
        %589 = vmatprep.subr.bf16.mxu0 0
        %590 = vmatpush1.bf16.msra.mxu0 0
        %591 = vmatprep.subr.bf16.mxu0 0
        %592 = vmatpush1.bf16.msra.mxu0 0
        %593 = vmatprep.subr.bf16.mxu0 0
        %594 = vmatpush1.bf16.msra.mxu0 0
        %595 = vmatprep.subr.bf16.mxu0 0
        %596 = vmatpush1.bf16.msra.mxu0 0
        %597 = vmatprep.subr.bf16.mxu0 0
        %598 = vmatpush1.bf16.msra.mxu0 0
        %599 = vmatprep.subr.bf16.mxu0 0
        %600 = vmatpush1.bf16.msra.mxu0 0
        %601 = vmatprep.subr.bf16.mxu0 0
        %602 = vmatpush1.bf16.msra.mxu0 0
        %603 = vmatprep.subr.bf16.mxu0 0
        %604 = vmatpush1.bf16.msra.mxu0 0
        %605 = vmatprep.subr.bf16.mxu0 0
        %606 = vmatpush1.bf16.msra.mxu0 0
        %607 = vmatprep.subr.bf16.mxu0 0
        %608 = vmatpush1.bf16.msra.mxu0 0
        %609 = vmatprep.mubr.bf16.mxu0 0
        %610 = vmatmul.mubr.bf16.gmra.mrb[0].mxu0 %v522
        %v611 = vpop.f32.mrb[0].mxu0
        %v612 = vadd.f32 %v518, %v611
        %v613 = vpop.f32.mrb[0].mxu0
        %v614 = vadd.f32 %v518, %v613
        %v615 = vpop.f32.mrb[0].mxu0
        %v616 = vpop.f32.mrb[0].mxu0
        %617 = vdwg.mxu0
        %vm618 = vcmp.gt.f32.partialorder %v571, 0.0
        %vm619 = vcmp.gt.f32.partialorder %v573, 0.0
        %vm620 = vcmp.gt.f32.partialorder %v612, 0.0
        %vm621 = vcmp.gt.f32.partialorder %v614, 0.0
        %v622 = vmul.f32 %v571, 0.2
        %v623 = vmul.f32 %v573, 0.2
        %v624 = vmul.f32 %v612, 0.2
        %v625 = vmul.f32 %v614, 0.2
        %v626 = vsel %vm618, %v571, %v622
        %v627 = vsel %vm619, %v573, %v623
        %v628 = vsel %vm620, %v612, %v624
        %v629 = vsel %vm621, %v614, %v625
        %v630 = vpack.c.bf16 %v626, %v626
        %v631 = vpack.c.bf16 %v627, %v627
        %v632 = vpack.c.bf16 %v628, %v628
        %v633 = vpack.c.bf16 %v629, %v629
        %v634 = vld [vmem:[%s1] sm:$0xf]
        %v637 = vunpack.c.l.s4 1966171168
        %v638 = vunpack.c.0.s8 %v637
        %v639 = vlaneseq
        %v640 = vshrl.u32 %v639, 7
        %v641 = vsub.s32 %v638, %v640
        %v642 = vrot.slane %v634, %v641
        %v643 = vcombine.high %v642, %v642
        %v645 = vunpack.c.l.s4 1966171168
        %v646 = vunpack.c.0.s8 %v645
        %v647 = vlaneseq
        %v648 = vshrl.u32 %v647, 7
        %v649 = vsub.s32 %v646, %v648
        %v650 = vrot.slane %v642, %v649
        %v652 = vunpack.c.l.s4 1966171168
        %v653 = vunpack.c.0.s8 %v652
        %v654 = vlaneseq
        %v655 = vshrl.u32 %v654, 7
        %v656 = vsub.s32 %v653, %v655
        %v657 = vrot.slane %v643, %v656
        %v658 = vcombine.high %v650, %v650
        %v659 = vcombine.high %v657, %v657
        %v661 = vpack.i.b16 %v650, %v650
        %v663 = vlaneseq
        %v664 = vshrl.u32 %v663, 7
        %v665 = vsub.s32 0, %v664
        %v666 = vrot.slane %v661, %v665
        %v668 = vpack.i.b16 %v657, %v657
        %v670 = vlaneseq
        %v671 = vshrl.u32 %v670, 7
        %v672 = vsub.s32 0, %v671
        %v673 = vrot.slane %v668, %v672
        %v675 = vpack.i.b16 %v658, %v658
        %v677 = vlaneseq
        %v678 = vshrl.u32 %v677, 7
        %v679 = vsub.s32 0, %v678
        %v680 = vrot.slane %v675, %v679
        %v682 = vpack.i.b16 %v659, %v659
        %v684 = vlaneseq
        %v685 = vshrl.u32 %v684, 7
        %v686 = vsub.s32 0, %v685
        %v687 = vrot.slane %v682, %v686
        %v688 = vmul.bf16 %v630, %v666
        %v689 = vmul.bf16 %v631, %v673
        %v690 = vmul.bf16 %v632, %v680
        %v691 = vmul.bf16 %v633, %v687
        %v696 = vrot.slane %v688, 6
        %v697 = vrot.slane %v689, 6
        %v698 = vrot.slane %v690, 6
        %v699 = vrot.slane %v691, 6
        %700 = vrot.lane.b32.xlu0 %v696, 127
        %v701 = vpop.permute.xlu0 %700
        %702 = vrot.lane.b32.xlu0 %v697, 127
        %v703 = vpop.permute.xlu0 %702
        %704 = vrot.lane.b32.xlu0 %v698, 127
        %v705 = vpop.permute.xlu0 %704
        %706 = vrot.lane.b32.xlu0 %v699, 127
        %v707 = vpop.permute.xlu0 %706
        %v708 = vsel %vm331, %v701, %v703
        %v709 = vsel %vm331, %v703, %v705
        %v710 = vsel %vm331, %v705, %v707
        %v711 = vrot.slane %v688, 4
        %v712 = vrot.slane %v689, 4
        %v713 = vrot.slane %v690, 4
        %v714 = vrot.slane %v691, 4
        %715 = vrot.lane.b32.xlu0 %v711, 126
        %v716 = vpop.permute.xlu0 %715
        %717 = vrot.lane.b32.xlu0 %v712, 126
        %v718 = vpop.permute.xlu0 %717
        %719 = vrot.lane.b32.xlu0 %v713, 126
        %v720 = vpop.permute.xlu0 %719
        %721 = vrot.lane.b32.xlu0 %v714, 126
        %v722 = vpop.permute.xlu0 %721
        %v723 = vsel %vm349, %v716, %v718
        %v724 = vsel %vm349, %v718, %v720
        %v725 = vsel %vm349, %v720, %v722
        %v726 = vrot.slane %v688, 2
        %v727 = vrot.slane %v689, 2
        %v728 = vrot.slane %v690, 2
        %v729 = vrot.slane %v691, 2
        %730 = vrot.lane.b32.xlu0 %v726, 110
        %v731 = vpop.permute.xlu0 %730
        %732 = vrot.lane.b32.xlu0 %v727, 110
        %v733 = vpop.permute.xlu0 %732
        %734 = vrot.lane.b32.xlu0 %v728, 110
        %v735 = vpop.permute.xlu0 %734
        %736 = vrot.lane.b32.xlu0 %v729, 110
        %v737 = vpop.permute.xlu0 %736
        %v738 = vsel %vm366, %v731, %v733
        %v739 = vsel %vm366, %v733, %v735
        %v740 = vsel %vm366, %v735, %v737
        %741 = vrot.lane.b32.xlu0 %v688, 109
        %v742 = vpop.permute.xlu0 %741
        %743 = vrot.lane.b32.xlu0 %v689, 109
        %v744 = vpop.permute.xlu0 %743
        %745 = vrot.lane.b32.xlu0 %v690, 109
        %v746 = vpop.permute.xlu0 %745
        %747 = vrot.lane.b32.xlu0 %v691, 109
        %v748 = vpop.permute.xlu0 %747
        %v749 = vsel %vm381, %v742, %v744
        %v750 = vsel %vm381, %v744, %v746
        %v751 = vsel %vm381, %v746, %v748
        %752 = vrot.lane.b32.xlu0 %v696, 108
        %v753 = vpop.permute.xlu0 %752
        %754 = vrot.lane.b32.xlu0 %v697, 108
        %v755 = vpop.permute.xlu0 %754
        %756 = vrot.lane.b32.xlu0 %v698, 108
        %v757 = vpop.permute.xlu0 %756
        %758 = vrot.lane.b32.xlu0 %v699, 108
        %v759 = vpop.permute.xlu0 %758
        %v760 = vsel %vm396, %v753, %v755
        %v761 = vsel %vm396, %v755, %v757
        %v762 = vsel %vm396, %v757, %v759
        %763 = vrot.lane.b32.xlu0 %v711, 92
        %v764 = vpop.permute.xlu0 %763
        %765 = vrot.lane.b32.xlu0 %v712, 92
        %v766 = vpop.permute.xlu0 %765
        %767 = vrot.lane.b32.xlu0 %v713, 92
        %v768 = vpop.permute.xlu0 %767
        %769 = vrot.lane.b32.xlu0 %v714, 92
        %v770 = vpop.permute.xlu0 %769
        %v771 = vsel %vm411, %v764, %v766
        %v772 = vsel %vm411, %v766, %v768
        %v773 = vsel %vm411, %v768, %v770
        %774 = vrot.lane.b32.xlu0 %v726, 91
        %v775 = vpop.permute.xlu0 %774
        %776 = vrot.lane.b32.xlu0 %v727, 91
        %v777 = vpop.permute.xlu0 %776
        %778 = vrot.lane.b32.xlu0 %v728, 91
        %v779 = vpop.permute.xlu0 %778
        %780 = vrot.lane.b32.xlu0 %v729, 91
        %v781 = vpop.permute.xlu0 %780
        %v782 = vsel %vm426, %v775, %v777
        %v783 = vsel %vm426, %v777, %v779
        %v784 = vsel %vm426, %v779, %v781
        %785 = vrot.lane.b32.xlu0 %v688, 90
        %v786 = vpop.permute.xlu0 %785
        %787 = vrot.lane.b32.xlu0 %v689, 90
        %v788 = vpop.permute.xlu0 %787
        %789 = vrot.lane.b32.xlu0 %v690, 90
        %v790 = vpop.permute.xlu0 %789
        %791 = vrot.lane.b32.xlu0 %v691, 90
        %v792 = vpop.permute.xlu0 %791
        %v793 = vsel %vm441, %v786, %v788
        %v794 = vsel %vm441, %v788, %v790
        %v795 = vsel %vm441, %v790, %v792
        %v797 = vcombine.low %v270, %v270
        %v799 = vunpack.c.l.s4 1983009808
        %v800 = vunpack.c.0.s8 %v799
        %v801 = vlaneseq
        %v802 = vshrl.u32 %v801, 7
        %v803 = vsub.s32 %v800, %v802
        %v804 = vrot.slane %v797, %v803
        %v806 = vunpack.c.l.s4 1983009808
        %v807 = vunpack.c.0.s8 %v806
        %v808 = vlaneseq
        %v809 = vshrl.u32 %v808, 7
        %v810 = vsub.s32 %v807, %v809
        %v811 = vrot.slane %v270, %v810
        %v812 = vcombine.high %v804, %v804
        %v813 = vcombine.high %v811, %v811
        %814 = vrot.lane.b32.xlu0 %v804, 90
        %v815 = vpop.permute.xlu0 %814
        %816 = vrot.lane.b32.xlu0 %v812, 90
        %v817 = vpop.permute.xlu0 %816
        %818 = vrot.lane.b32.xlu0 %v811, 90
        %v819 = vpop.permute.xlu0 %818
        %820 = vrot.lane.b32.xlu0 %v813, 90
        %v821 = vpop.permute.xlu0 %820
        %v822 = vsel %vm441, %v815, %v817
        %v823 = vsel %vm441, %v817, %v819
        %v824 = vsel %vm441, %v819, %v821
        %v827 = vsel %vm446, %v688, %v708
        %v830 = vsel %vm446, %v689, %v709
        %v833 = vsel %vm446, %v690, %v710
        %v835 = vsel %vm459, %v827, %v723
        %v837 = vsel %vm459, %v830, %v724
        %v839 = vsel %vm459, %v833, %v725
        %v841 = vsel %vm468, %v835, %v738
        %v844 = vsel %vm468, %v837, %v739
        %v847 = vsel %vm468, %v839, %v740
        %v851 = vsel %vm446, %v749, %v760
        %v854 = vsel %vm446, %v750, %v761
        %v857 = vsel %vm446, %v751, %v762
        %v859 = vsel %vm459, %v851, %v771
        %v861 = vsel %vm459, %v854, %v772
        %v863 = vsel %vm459, %v857, %v773
        %v865 = vsel %vm468, %v859, %v782
        %v868 = vsel %vm468, %v861, %v783
        %v871 = vsel %vm468, %v863, %v784
        %v875 = vsel %vm446, %v793, %v822
        %v878 = vsel %vm446, %v794, %v823
        %v881 = vsel %vm446, %v795, %v824
        %v882 = vld [vmem:[%s4] sm:$0xf]
        %v883 = vld [vmem:[%s5] sm:$0xff]
        %885 = vset.pattern.permute.xlu0 0
        %886 = vperm.xlu0 %885, %v883
        %v887 = vpop.permute.xlu0 %886
        %vm889 = vcmask 326656
        %v891 = vsel %vm889, %v882, 0
        %v893 = vsel %vm459, %v875, 0
        %v895 = vsel %vm459, %v878, 0
        %v897 = vsel %vm459, %v881, 0
        %899 = vmatprep.subr.bf16.mxu0 %v844
        %900 = vmatpush1.bf16.msra.mxu0 %v841
        %901 = vmatprep.subr.bf16.mxu0 %v868
        %902 = vmatpush1.bf16.msra.mxu0 %v865
        %903 = vmatprep.subr.bf16.mxu0 %v895
        %904 = vmatpush1.bf16.msra.mxu0 %v893
        %905 = vmatprep.subr.bf16.mxu0 0
        %906 = vmatpush1.bf16.msra.mxu0 0
        %907 = vmatprep.subr.bf16.mxu0 0
        %908 = vmatpush1.bf16.msra.mxu0 0
        %909 = vmatprep.subr.bf16.mxu0 0
        %910 = vmatpush1.bf16.msra.mxu0 0
        %911 = vmatprep.subr.bf16.mxu0 0
        %912 = vmatpush1.bf16.msra.mxu0 0
        %913 = vmatprep.subr.bf16.mxu0 0
        %914 = vmatpush1.bf16.msra.mxu0 0
        %915 = vmatprep.subr.bf16.mxu0 0
        %916 = vmatpush1.bf16.msra.mxu0 0
        %917 = vmatprep.subr.bf16.mxu0 0
        %918 = vmatpush1.bf16.msra.mxu0 0
        %919 = vmatprep.subr.bf16.mxu0 0
        %920 = vmatpush1.bf16.msra.mxu0 0
        %921 = vmatprep.subr.bf16.mxu0 0
        %922 = vmatpush1.bf16.msra.mxu0 0
        %923 = vmatprep.subr.bf16.mxu0 0
        %924 = vmatpush1.bf16.msra.mxu0 0
        %925 = vmatprep.subr.bf16.mxu0 0
        %926 = vmatpush1.bf16.msra.mxu0 0
        %927 = vmatprep.subr.bf16.mxu0 0
        %928 = vmatpush1.bf16.msra.mxu0 0
        %929 = vmatprep.subr.bf16.mxu0 0
        %930 = vmatpush1.bf16.msra.mxu0 0
        %931 = vmatprep.mubr.bf16.mxu0 0
        %932 = vmatmul.mubr.bf16.gmra.mrb[0].mxu0 %v891
        %v933 = vpop.f32.mrb[0].mxu0
        %v934 = vadd.f32 %v887, %v933
        %v935 = vpop.f32.mrb[0].mxu0
        %v936 = vadd.f32 %v887, %v935
        %v937 = vpop.f32.mrb[0].mxu0
        %v938 = vpop.f32.mrb[0].mxu0
        %939 = vdwg.mxu0
        %940 = vmatprep.subr.bf16.mxu0 0
        %941 = vmatpush1.bf16.msra.mxu0 %v847
        %942 = vmatprep.subr.bf16.mxu0 0
        %943 = vmatpush1.bf16.msra.mxu0 %v871
        %944 = vmatprep.subr.bf16.mxu0 0
        %945 = vmatpush1.bf16.msra.mxu0 %v897
        %946 = vmatprep.subr.bf16.mxu0 0
        %947 = vmatpush1.bf16.msra.mxu0 0
        %948 = vmatprep.subr.bf16.mxu0 0
        %949 = vmatpush1.bf16.msra.mxu0 0
        %950 = vmatprep.subr.bf16.mxu0 0
        %951 = vmatpush1.bf16.msra.mxu0 0
        %952 = vmatprep.subr.bf16.mxu0 0
        %953 = vmatpush1.bf16.msra.mxu0 0
        %954 = vmatprep.subr.bf16.mxu0 0
        %955 = vmatpush1.bf16.msra.mxu0 0
        %956 = vmatprep.subr.bf16.mxu0 0
        %957 = vmatpush1.bf16.msra.mxu0 0
        %958 = vmatprep.subr.bf16.mxu0 0
        %959 = vmatpush1.bf16.msra.mxu0 0
        %960 = vmatprep.subr.bf16.mxu0 0
        %961 = vmatpush1.bf16.msra.mxu0 0
        %962 = vmatprep.subr.bf16.mxu0 0
        %963 = vmatpush1.bf16.msra.mxu0 0
        %964 = vmatprep.subr.bf16.mxu0 0
        %965 = vmatpush1.bf16.msra.mxu0 0
        %966 = vmatprep.subr.bf16.mxu0 0
        %967 = vmatpush1.bf16.msra.mxu0 0
        %968 = vmatprep.subr.bf16.mxu0 0
        %969 = vmatpush1.bf16.msra.mxu0 0
        %970 = vmatprep.subr.bf16.mxu0 0
        %971 = vmatpush1.bf16.msra.mxu0 0
        %972 = vmatprep.mubr.bf16.mxu0 0
        %973 = vmatmul.mubr.bf16.gmra.mrb[0].mxu0 %v891
        %v974 = vpop.f32.mrb[0].mxu0
        %v975 = vadd.f32 %v887, %v974
        %v976 = vpop.f32.mrb[0].mxu0
        %v977 = vpop.f32.mrb[0].mxu0
        %v978 = vpop.f32.mrb[0].mxu0
        %979 = vdwg.mxu0
        %v980 = vmul.f32 %v934, 0.70710677
        %v981 = vmul.f32 %v936, 0.70710677
        %v982 = vmul.f32 %v975, 0.70710677
        %v983 = vpack.c.bf16 %v980, %v980
        %v984 = vpack.c.bf16 %v981, %v981
        %v985 = vpack.c.bf16 %v982, %v982
        %v989 = vunpack.c.l.b16 %v983
        %v990 = vunpack.c.l.b16 %v984
        %v991 = vunpack.c.l.b16 %v985
        %v992 = vpack.c.b16 %v990, %v989
        %v993 = vpack.c.b16 %v991, %v991
        %996 = vst [vmem:[%s267] sm:$0xff] %v992
        %997 = vst [vmem:[%s267 + $0x8] sm:$0xf] %v993
        %s998 = sand.u32 %s162, 1
        %s999 = scalar_lea.sflag [#allocation4], %s998
        %s1000 = sand.u32 %s162, 1
        %s1001 = smul.addr %s1000, 12
        %s1002 = scalar_lea.vmem [#allocation5], %s1001
        // Predicated region
        $region49: #{tpu_custom_call.1} parent=43 // pred_check
          %p1003 = pneg %p172
        $region50: #{tpu_custom_call.1} parent=43 // pred_check_branch
          %1005 = sbr.rel (%p1003) target = $region52
        $region51: #{tpu_custom_call.1} parent=43 // pred_region
          %s1007 = ssub.s32 192, 192
          %1008 = vsyncadd %s999, %s1007
          %s1009 = smul.addr %s23, 3
          %s1010 = smul.addr %s1009, 64
          %s1011 = scalar_lea.hbm %s6, %s1010
          %s1013 = sshll.u32 %s1002, 4
          %s1014 = int_to_ptr.vmem [resolvable:$true] %s1013
          %1016 = dma.vmem_to_hbm [thread:$0]  %s1014, 192, %s1011, %s999
        $region52: #{tpu_custom_call.1} parent=43 // pred_fallthru
          _
      $region44: #{tpu_custom_call.1} parent=5 // pred_fallthru
        _
      %p1017 = scmp.le.s32.totalorder 2, %s18
      // Predicated region
      $region53: #{tpu_custom_call.1} parent=5 // pred_check
        %p1018 = pneg %p1017
      $region54: #{tpu_custom_call.1} parent=5 // pred_check_branch
        %1020 = sbr.rel (%p1018) target = $region56
      $region55: #{tpu_custom_call.1} parent=5 // pred_region
        %s1021 = ssub.s32 %s18, 2
        // Predicated region
        $region57: #{tpu_custom_call.1} parent=55 // pred_check
          %p1022 = pneg %p178
        $region58: #{tpu_custom_call.1} parent=55 // pred_check_branch
          %1024 = sbr.rel (%p1022) target = $region60
        $region59: #{tpu_custom_call.1} parent=55 // pred_region
          %s1025 = sand.u32 %s163, 1
          %s1026 = scalar_lea.sflag [#allocation4], %s1025
          %s1027 = sand.u32 %s163, 1
          %s1028 = smul.addr %s1027, 12
          %s1029 = scalar_lea.vmem [#allocation5], %s1028
          %1030 = dma.done %s1026, 192
        $region60: #{tpu_custom_call.1} parent=55 // pred_fallthru
          _
      $region56: #{tpu_custom_call.1} parent=5 // pred_fallthru
        _
    $region6: #{tpu_custom_call.1} parent=1 // loop_footer
      %s22 = sadd.s32 1, %s18
    $region7: #{tpu_custom_call.1} parent=1 // loop_footer_branch
      %17 = sbr.rel target = $region3
    $region8: #{tpu_custom_call.1} parent=1 // loop_exit
      _
    %1031 = vsyncpa [#allocation3], 1
    %s1032 = scalar_lea.sflag [#allocation3], 1
    %1033 = vsyncpa %s1032, 1
    %1034 = vsyncpa [#allocation4], 1
    %s1035 = scalar_lea.sflag [#allocation4], 1
    %1036 = vsyncpa %s1035, 1

</llo_original>
